<compile_context>
chip_gen: v7x
topology: tpu7x:2x2x1
jax: 0.10.0
libtpu: 0.0.40
codegen_flags: <defaults>
</compile_context>

<pallas_src>
import functools

import jax
import jax.numpy as jnp
from jax.experimental import pallas as pl
from jax.experimental.pallas import tpu as pltpu

EPS = 1e-5
NEG_SLOPE = 0.2


def _round_up(v, m):
    return (v + m - 1) // m * m


def _pick_block_samples(n, per_sample_bytes, target_bytes):
    """Largest divisor of n whose per-step block stays under target_bytes while leaving at
    least 2 grid steps when n >= 2 (so both v7x TensorCores get work)."""
    limit = n if n < 2 else n // 2
    best = 1
    for nb in range(1, limit + 1):
        if n % nb == 0 and nb * per_sample_bytes <= target_bytes:
            best = nb
    return best


def conv2d_layer(x, weight, bias, gamma, beta, *, kernel_size=4, stride=2, padding=1,
                 compute_dtype=jnp.bfloat16):
    """LeakyReLU(0.2) -> Conv2d(K=4, s=2, p=1) -> BatchNorm2d (training-mode batch stats).

    x: (N, C_in, H, W) NCHW.  Returns (N, C_out, Ho, Wo) NCHW float32.
    compute_dtype=bfloat16 halves HBM/VMEM bytes for matmul operands and the inter-pass
    buffer; accumulation, BN statistics and the normalization math stay in float32.
    """
    del bias  # A conv bias is cancelled exactly by the BatchNorm batch-mean subtraction.

    N, C_in, H, W = x.shape
    C_out = weight.shape[0]
    if not (kernel_size == 4 and stride == 2 and padding == 1 and H % 2 == 0 and W % 2 == 0):
        raise NotImplementedError("specialised for kernel_size=4, stride=2, padding=1, even H/W")

    Ho, Wo = H // 2, W // 2
    Hq, Wq = Ho + 1, Wo + 1          # padded input, split by row/col parity
    G = 4 * C_in                     # contraction rows per (ph, pw) shift: (rh, rw, ci)
    Lout = _round_up(Ho * Wq, 128)   # extended output lanes per sample (lane-dense, aligned)
    Lseg = _round_up(Lout + Wq + 1, 128)   # per-sample plane segment (covers max shift Wq+1)
    M = Ho * Wo                      # valid output pixels per sample

    inter_dtype = compute_dtype      # dtype of the inter-pass conv result
    csize = jnp.dtype(compute_dtype).itemsize
    isize = jnp.dtype(inter_dtype).itemsize

    # ---- wrapper-side relayout (pure relayout + zero pad; no 4x im2col replication) ------
    # planes[n, (rh*2+rw)*C_in + ci, i*Wq + j] = x_pad[n, ci, 2*i + rh, 2*j + rw]
    xp = jnp.pad(x, ((0, 0), (0, 0), (padding, padding), (padding, padding)))
    planes = (xp.reshape(N, C_in, Hq, 2, Wq, 2)
                .transpose(0, 3, 5, 1, 2, 4)            # (n, rh, rw, ci, i, j)
                .reshape(N, G, Hq * Wq))
    planes = jnp.pad(planes, ((0, 0), (0, 0), (0, Lseg - Hq * Wq))).astype(compute_dtype)

    # conv weight (C_out, C_in, 4, 4) -> (4, C_out, G): one (C_out, G) slab per (ph, pw)
    # shift, columns ordered (rh, rw, ci) to match the planes layout (kh=2ph+rh, kw=2pw+rw).
    w_all = (weight.reshape(C_out, C_in, 2, 2, 2, 2)     # (co, ci, ph, rh, pw, rw)
                   .transpose(2, 4, 0, 3, 5, 1)          # (ph, pw, co, rh, rw, ci)
                   .reshape(4, C_out, G)
                   .astype(compute_dtype))

    # valid-output-lane mask (the same for every sample segment)
    lane = jnp.arange(Lout, dtype=jnp.int32)
    mask = ((lane < Ho * Wq) & ((lane % Wq) < Wo)).astype(jnp.float32).reshape(1, Lout)

    shift_offs = (0, 1, Wq, Wq + 1)                      # lane offset of each (ph, pw) shift

    # ---- pass 1: fused LeakyReLU + conv (4 accumulating MXU matmuls/sample) + stats ------
    per_sample_p1 = G * Lseg * csize + C_out * Lout * isize
    Nb = _pick_block_samples(N, per_sample_p1, target_bytes=6 << 20)
    NB = N // Nb
    p1_vmem = int(min(max(2 * (Nb * per_sample_p1 + 4 * C_out * G * csize
                               + Lout * 4 + 2 * C_out * 4) + (2 << 20), 4 << 20), 64 << 20))

    def conv_kernel(planes_ref, w_ref, mask_ref, y_ref, s_ref, q_ref):
        msk = mask_ref[...]                              # (1, Lout) f32
        s_acc = jnp.zeros((C_out, 1), jnp.float32)
        q_acc = jnp.zeros((C_out, 1), jnp.float32)
        for n in range(Nb):                              # small, VMEM-budgeted unroll
            y = jnp.zeros((C_out, Lout), jnp.float32)
            for s, off in enumerate(shift_offs):
                a = planes_ref[n, :, off:off + Lout]     # (G, Lout), unit-stride lane read
                a = jnp.where(a >= 0, a, a * NEG_SLOPE)  # LeakyReLU folded into the read
                y = y + jnp.dot(w_ref[s], a, preferred_element_type=jnp.float32)
            ym = y * msk                                 # mask phantom lanes out of the stats
            s_acc = s_acc + jnp.sum(ym, axis=1, keepdims=True)
            q_acc = q_acc + jnp.sum(ym * y, axis=1, keepdims=True)
            y_ref[n] = y.astype(y_ref.dtype)
        s_ref[0] = s_acc
        q_ref[0] = q_acc

    y_ext, sums, ssqs = pl.pallas_call(
        conv_kernel,
        grid=(NB,),
        in_specs=[
            pl.BlockSpec((Nb, G, Lseg), lambda i: (i, 0, 0)),
            pl.BlockSpec((4, C_out, G), lambda i: (0, 0, 0)),
            pl.BlockSpec((1, Lout), lambda i: (0, 0)),
        ],
        out_specs=[
            pl.BlockSpec((Nb, C_out, Lout), lambda i: (i, 0, 0)),
            pl.BlockSpec((1, C_out, 1), lambda i: (i, 0, 0)),
            pl.BlockSpec((1, C_out, 1), lambda i: (i, 0, 0)),
        ],
        out_shape=(
            jax.ShapeDtypeStruct((N, C_out, Lout), inter_dtype),
            jax.ShapeDtypeStruct((NB, C_out, 1), jnp.float32),
            jax.ShapeDtypeStruct((NB, C_out, 1), jnp.float32),
        ),
        compiler_params=pltpu.CompilerParams(
            dimension_semantics=("parallel",), vmem_limit_bytes=p1_vmem),
    )(planes, w_all, mask)

    # ---- finalize batch statistics once (tiny XLA op) ------------------------------------
    inv_count = 1.0 / float(N * M)
    sum_c = jnp.sum(sums, axis=0)                        # (C_out, 1) batch sum
    ssq_c = jnp.sum(ssqs, axis=0)                        # (C_out, 1) batch sum of squares
    mean = sum_c * inv_count
    var = jnp.maximum(ssq_c * inv_count - mean * mean, 0.0)   # biased var (BN training mode)
    scale = gamma.reshape(C_out, 1).astype(jnp.float32) * jax.lax.rsqrt(var + EPS)
    shift = beta.reshape(C_out, 1).astype(jnp.float32) - mean * scale
    scale = scale.reshape(1, C_out, 1)
    shift = shift.reshape(1, C_out, 1)

    # ---- pass 2: apply affine BN on large lane-dense blocks, aliased onto y_ext ----------
    per_sample_p2 = 2 * C_out * Lout * isize             # input block + aliased output block
    Nb2 = _pick_block_samples(N, per_sample_p2, target_bytes=12 << 20)
    NB2 = N // Nb2
    p2_vmem = int(min(max(2 * (Nb2 * per_sample_p2 + 2 * C_out * 4) + (2 << 20),
                          4 << 20), 64 << 20))

    def bn_kernel(y_ref, scale_ref, shift_ref, o_ref):
        y = y_ref[...].astype(jnp.float32)
        o_ref[...] = (y * scale_ref[...] + shift_ref[...]).astype(o_ref.dtype)

    out_ext = pl.pallas_call(
        bn_kernel,
        grid=(NB2,),
        in_specs=[
            pl.BlockSpec((Nb2, C_out, Lout), lambda i: (i, 0, 0)),
            pl.BlockSpec((1, C_out, 1), lambda i: (0, 0, 0)),
            pl.BlockSpec((1, C_out, 1), lambda i: (0, 0, 0)),
        ],
        out_specs=pl.BlockSpec((Nb2, C_out, Lout), lambda i: (i, 0, 0)),
        out_shape=jax.ShapeDtypeStruct((N, C_out, Lout), inter_dtype),
        input_output_aliases={0: 0},
        compiler_params=pltpu.CompilerParams(
            dimension_semantics=("parallel",), vmem_limit_bytes=p2_vmem),
    )(y_ext, scale, shift)

    # Drop the phantom lanes and upcast while extracting NCHW (fused XLA slice under jit).
    out = (out_ext[:, :, :Ho * Wq]
           .reshape(N, C_out, Ho, Wq)[:, :, :, :Wo]
           .astype(jnp.float32))
    return out


def _reference(x, weight, bias, gamma, beta, stride=2, padding=1):
    # Pure-JAX (f32) reference of the same forward pass for validation.
    act = jnp.where(x >= 0, x, NEG_SLOPE * x)
    y = jax.lax.conv_general_dilated(
        act.astype(jnp.float32), weight.astype(jnp.float32),
        window_strides=(stride, stride),
        padding=((padding, padding), (padding, padding)),
        dimension_numbers=("NCHW", "OIHW", "NCHW"),
    ) + bias.reshape(1, -1, 1, 1)
    mean = jnp.mean(y, axis=(0, 2, 3), keepdims=True)
    var = jnp.mean((y - mean) ** 2, axis=(0, 2, 3), keepdims=True)
    return (gamma.reshape(1, -1, 1, 1) * (y - mean) * jax.lax.rsqrt(var + EPS)
            + beta.reshape(1, -1, 1, 1))


if __name__ == "__main__":
    # Small shapes consistent with the module: in_channels=4, out_channels=8, k=4, s=2, p=1.
    N, C_in, H, W = 2, 4, 16, 16
    C_out, K = 8, 4

    key = jax.random.PRNGKey(0)
    kx, kw, kb, kg, kbe = jax.random.split(key, 5)
    x = jax.random.normal(kx, (N, C_in, H, W), dtype=jnp.float32)
    weight = 0.1 * jax.random.normal(kw, (C_out, C_in, K, K), dtype=jnp.float32)  # OIHW
    bias = 0.1 * jax.random.normal(kb, (C_out,), dtype=jnp.float32)
    gamma = 1.0 + 0.1 * jax.random.normal(kg, (C_out,), dtype=jnp.float32)
    beta = 0.1 * jax.random.normal(kbe, (C_out,), dtype=jnp.float32)

    ref = _reference(x, weight, bias, gamma, beta)

    # f32 path: proves algorithmic correctness at tight tolerance.
    fwd_f32 = jax.jit(functools.partial(conv2d_layer, compute_dtype=jnp.float32))
    out_f32 = jax.block_until_ready(fwd_f32(x, weight, bias, gamma, beta))
    assert out_f32.shape == (N, C_out, H // 2, W // 2), out_f32.shape
    err32 = float(jnp.max(jnp.abs(out_f32 - ref)))
    assert jnp.allclose(out_f32, ref, atol=1e-4, rtol=1e-4), err32

    # Default bf16-operand path (perf default): same math, looser tolerance.
    fwd_bf16 = jax.jit(conv2d_layer)
    out_bf16 = jax.block_until_ready(fwd_bf16(x, weight, bias, gamma, beta))
    assert out_bf16.shape == (N, C_out, H // 2, W // 2), out_bf16.shape
    err16 = float(jnp.max(jnp.abs(out_bf16 - ref)))
    assert jnp.allclose(out_bf16, ref, atol=5e-2, rtol=5e-2), err16

    print("KERNEL_OK")
</pallas_src>

<mosaic_0001>
module attributes {stable_mosaic.version = 11 : i64} {
  func.func @conv_kernel(%arg0: i32, %arg1: memref<1x16x256xf32, #tpu.memory_space<vmem>>, %arg2: memref<4x8x16xf32, #tpu.memory_space<vmem>>, %arg3: memref<1x128xf32, #tpu.memory_space<vmem>>, %arg4: memref<1x8x128xf32, #tpu.memory_space<vmem>>, %arg5: memref<1x8x1xf32, #tpu.memory_space<vmem>>, %arg6: memref<1x8x1xf32, #tpu.memory_space<vmem>>) attributes {dimension_semantics = [#tpu.dimension_semantics<parallel>], iteration_bounds = array<i64: 2>, scalar_prefetch = 0 : i64, scratch_operands = 0 : i64, tpu.core_type = #tpu.core_type<tc>, window_params = [{transform_indices = @transform_0, window_bounds = array<i64: 1, 16, 256>}, {pipeline_mode = #tpu.pipeline_mode<synchronous>, transform_indices = @transform_1, window_bounds = array<i64: 4, 8, 16>}, {pipeline_mode = #tpu.pipeline_mode<synchronous>, transform_indices = @transform_2, window_bounds = array<i64: 1, 128>}, {transform_indices = @transform_3, window_bounds = array<i64: 1, 8, 128>}, {transform_indices = @transform_4, window_bounds = array<i64: 1, 8, 1>}, {transform_indices = @transform_5, window_bounds = array<i64: 1, 8, 1>}]} {
    %c0 = arith.constant 0 : index
    %c0_0 = arith.constant 0 : index
    %0 = vector.load %arg3[%c0, %c0_0] : memref<1x128xf32, #tpu.memory_space<vmem>>, vector<1x128xf32>
    %cst = arith.constant 0.000000e+00 : f32
    %1 = vector.broadcast %cst : f32 to vector<8x1xf32>
    %cst_1 = arith.constant 0.000000e+00 : f32
    %2 = vector.broadcast %cst_1 : f32 to vector<8x1xf32>
    %cst_2 = arith.constant 0.000000e+00 : f32
    %3 = vector.broadcast %cst_2 : f32 to vector<8x128xf32>
    %c0_3 = arith.constant 0 : index
    %c0_4 = arith.constant 0 : index
    %c0_5 = arith.constant 0 : index
    %4 = vector.load %arg1[%c0_3, %c0_4, %c0_5] : memref<1x16x256xf32, #tpu.memory_space<vmem>>, vector<1x16x128xf32>
    %5 = vector.shape_cast %4 : vector<1x16x128xf32> to vector<16x128xf32>
    %cst_6 = arith.constant 0.000000e+00 : f32
    %6 = vector.broadcast %cst_6 : f32 to vector<16x128xf32>
    %7 = arith.cmpf oge, %5, %6 : vector<16x128xf32>
    %cst_7 = arith.constant 2.000000e-01 : f32
    %8 = vector.broadcast %cst_7 : f32 to vector<16x128xf32>
    %9 = arith.mulf %5, %8 : vector<16x128xf32>
    %10 = arith.select %7, %5, %9 : vector<16x128xi1>, vector<16x128xf32>
    %c0_8 = arith.constant 0 : index
    %c0_9 = arith.constant 0 : index
    %c0_10 = arith.constant 0 : index
    %11 = vector.load %arg2[%c0_8, %c0_9, %c0_10] : memref<4x8x16xf32, #tpu.memory_space<vmem>>, vector<1x8x16xf32>
    %12 = vector.shape_cast %11 : vector<1x8x16xf32> to vector<8x16xf32>
    %cst_11 = arith.constant dense<0.000000e+00> : vector<8x128xf32>
    %13 = tpu.matmul %12, %10, %cst_11 {dimension_numbers = #tpu.dot_dimension_numbers<[1], [0], [0], [1], [0, 0, 1, 1], [], []>} : vector<8x16xf32>, vector<16x128xf32>, vector<8x128xf32> -> vector<8x128xf32>
    %14 = arith.addf %3, %13 : vector<8x128xf32>
    %c0_12 = arith.constant 0 : index
    %c0_13 = arith.constant 0 : index
    %c1 = arith.constant 1 : index
    %15 = vector.load %arg1[%c0_12, %c0_13, %c1] : memref<1x16x256xf32, #tpu.memory_space<vmem>>, vector<1x16x128xf32>
    %16 = vector.shape_cast %15 : vector<1x16x128xf32> to vector<16x128xf32>
    %cst_14 = arith.constant 0.000000e+00 : f32
    %17 = vector.broadcast %cst_14 : f32 to vector<16x128xf32>
    %18 = arith.cmpf oge, %16, %17 : vector<16x128xf32>
    %cst_15 = arith.constant 2.000000e-01 : f32
    %19 = vector.broadcast %cst_15 : f32 to vector<16x128xf32>
    %20 = arith.mulf %16, %19 : vector<16x128xf32>
    %21 = arith.select %18, %16, %20 : vector<16x128xi1>, vector<16x128xf32>
    %c1_16 = arith.constant 1 : index
    %c0_17 = arith.constant 0 : index
    %c0_18 = arith.constant 0 : index
    %22 = vector.load %arg2[%c1_16, %c0_17, %c0_18] : memref<4x8x16xf32, #tpu.memory_space<vmem>>, vector<1x8x16xf32>
    %23 = vector.shape_cast %22 : vector<1x8x16xf32> to vector<8x16xf32>
    %cst_19 = arith.constant dense<0.000000e+00> : vector<8x128xf32>
    %24 = tpu.matmul %23, %21, %cst_19 {dimension_numbers = #tpu.dot_dimension_numbers<[1], [0], [0], [1], [0, 0, 1, 1], [], []>} : vector<8x16xf32>, vector<16x128xf32>, vector<8x128xf32> -> vector<8x128xf32>
    %25 = arith.addf %14, %24 : vector<8x128xf32>
    %c0_20 = arith.constant 0 : index
    %c0_21 = arith.constant 0 : index
    %c9 = arith.constant 9 : index
    %26 = vector.load %arg1[%c0_20, %c0_21, %c9] : memref<1x16x256xf32, #tpu.memory_space<vmem>>, vector<1x16x128xf32>
    %27 = vector.shape_cast %26 : vector<1x16x128xf32> to vector<16x128xf32>
    %cst_22 = arith.constant 0.000000e+00 : f32
    %28 = vector.broadcast %cst_22 : f32 to vector<16x128xf32>
    %29 = arith.cmpf oge, %27, %28 : vector<16x128xf32>
    %cst_23 = arith.constant 2.000000e-01 : f32
    %30 = vector.broadcast %cst_23 : f32 to vector<16x128xf32>
    %31 = arith.mulf %27, %30 : vector<16x128xf32>
    %32 = arith.select %29, %27, %31 : vector<16x128xi1>, vector<16x128xf32>
    %c2 = arith.constant 2 : index
    %c0_24 = arith.constant 0 : index
    %c0_25 = arith.constant 0 : index
    %33 = vector.load %arg2[%c2, %c0_24, %c0_25] : memref<4x8x16xf32, #tpu.memory_space<vmem>>, vector<1x8x16xf32>
    %34 = vector.shape_cast %33 : vector<1x8x16xf32> to vector<8x16xf32>
    %cst_26 = arith.constant dense<0.000000e+00> : vector<8x128xf32>
    %35 = tpu.matmul %34, %32, %cst_26 {dimension_numbers = #tpu.dot_dimension_numbers<[1], [0], [0], [1], [0, 0, 1, 1], [], []>} : vector<8x16xf32>, vector<16x128xf32>, vector<8x128xf32> -> vector<8x128xf32>
    %36 = arith.addf %25, %35 : vector<8x128xf32>
    %c0_27 = arith.constant 0 : index
    %c0_28 = arith.constant 0 : index
    %c10 = arith.constant 10 : index
    %37 = vector.load %arg1[%c0_27, %c0_28, %c10] : memref<1x16x256xf32, #tpu.memory_space<vmem>>, vector<1x16x128xf32>
    %38 = vector.shape_cast %37 : vector<1x16x128xf32> to vector<16x128xf32>
    %cst_29 = arith.constant 0.000000e+00 : f32
    %39 = vector.broadcast %cst_29 : f32 to vector<16x128xf32>
    %40 = arith.cmpf oge, %38, %39 : vector<16x128xf32>
    %cst_30 = arith.constant 2.000000e-01 : f32
    %41 = vector.broadcast %cst_30 : f32 to vector<16x128xf32>
    %42 = arith.mulf %38, %41 : vector<16x128xf32>
    %43 = arith.select %40, %38, %42 : vector<16x128xi1>, vector<16x128xf32>
    %c3 = arith.constant 3 : index
    %c0_31 = arith.constant 0 : index
    %c0_32 = arith.constant 0 : index
    %44 = vector.load %arg2[%c3, %c0_31, %c0_32] : memref<4x8x16xf32, #tpu.memory_space<vmem>>, vector<1x8x16xf32>
    %45 = vector.shape_cast %44 : vector<1x8x16xf32> to vector<8x16xf32>
    %cst_33 = arith.constant dense<0.000000e+00> : vector<8x128xf32>
    %46 = tpu.matmul %45, %43, %cst_33 {dimension_numbers = #tpu.dot_dimension_numbers<[1], [0], [0], [1], [0, 0, 1, 1], [], []>} : vector<8x16xf32>, vector<16x128xf32>, vector<8x128xf32> -> vector<8x128xf32>
    %47 = arith.addf %36, %46 : vector<8x128xf32>
    %48 = vector.broadcast %0 : vector<1x128xf32> to vector<8x128xf32>
    %49 = arith.mulf %47, %48 : vector<8x128xf32>
    %cst_34 = arith.constant dense<0.000000e+00> : vector<8xf32>
    %50 = vector.multi_reduction <add>, %49, %cst_34 [1] : vector<8x128xf32> to vector<8xf32>
    %51 = vector.shape_cast %50 : vector<8xf32> to vector<8x1xf32>
    %52 = arith.addf %1, %51 : vector<8x1xf32>
    %53 = arith.mulf %49, %47 : vector<8x128xf32>
    %cst_35 = arith.constant dense<0.000000e+00> : vector<8xf32>
    %54 = vector.multi_reduction <add>, %53, %cst_35 [1] : vector<8x128xf32> to vector<8xf32>
    %55 = vector.shape_cast %54 : vector<8xf32> to vector<8x1xf32>
    %56 = arith.addf %2, %55 : vector<8x1xf32>
    %c0_36 = arith.constant 0 : index
    %c0_37 = arith.constant 0 : index
    %c0_38 = arith.constant 0 : index
    %57 = vector.load %arg4[%c0_36, %c0_37, %c0_38] : memref<1x8x128xf32, #tpu.memory_space<vmem>>, vector<1x8x128xf32>
    %58 = vector.shape_cast %57 : vector<1x8x128xf32> to vector<8x128xf32>
    %59 = vector.shape_cast %47 : vector<8x128xf32> to vector<1x8x128xf32>
    tpu.vector_store %arg4[%c0_36, %c0_37, %c0_38], %59 {strides = array<i32>} : memref<1x8x128xf32, #tpu.memory_space<vmem>>, vector<1x8x128xf32>,
    %c0_39 = arith.constant 0 : index
    %c0_40 = arith.constant 0 : index
    %c0_41 = arith.constant 0 : index
    %60 = vector.load %arg5[%c0_39, %c0_40, %c0_41] : memref<1x8x1xf32, #tpu.memory_space<vmem>>, vector<1x8x1xf32>
    %61 = vector.shape_cast %60 : vector<1x8x1xf32> to vector<8x1xf32>
    %62 = vector.shape_cast %52 : vector<8x1xf32> to vector<1x8x1xf32>
    tpu.vector_store %arg5[%c0_39, %c0_40, %c0_41], %62 {strides = array<i32>} : memref<1x8x1xf32, #tpu.memory_space<vmem>>, vector<1x8x1xf32>,
    %c0_42 = arith.constant 0 : index
    %c0_43 = arith.constant 0 : index
    %c0_44 = arith.constant 0 : index
    %63 = vector.load %arg6[%c0_42, %c0_43, %c0_44] : memref<1x8x1xf32, #tpu.memory_space<vmem>>, vector<1x8x1xf32>
    %64 = vector.shape_cast %63 : vector<1x8x1xf32> to vector<8x1xf32>
    %65 = vector.shape_cast %56 : vector<8x1xf32> to vector<1x8x1xf32>
    tpu.vector_store %arg6[%c0_42, %c0_43, %c0_44], %65 {strides = array<i32>} : memref<1x8x1xf32, #tpu.memory_space<vmem>>, vector<1x8x1xf32>,
    return
  }
  func.func @transform_0(%arg0: i32) -> (i32, i32, i32) {
    %c0_i32 = arith.constant 0 : i32
    %c0_i32_0 = arith.constant 0 : i32
    %c0_i32_1 = arith.constant 0 : i32
    return %arg0, %c0_i32, %c0_i32_0 : i32, i32, i32
  }
  func.func @transform_1(%arg0: i32) -> (i32, i32, i32) {
    %c0_i32 = arith.constant 0 : i32
    %c0_i32_0 = arith.constant 0 : i32
    %c0_i32_1 = arith.constant 0 : i32
    %c0_i32_2 = arith.constant 0 : i32
    return %c0_i32, %c0_i32_0, %c0_i32_1 : i32, i32, i32
  }
  func.func @transform_2(%arg0: i32) -> (i32, i32) {
    %c0_i32 = arith.constant 0 : i32
    %c0_i32_0 = arith.constant 0 : i32
    %c0_i32_1 = arith.constant 0 : i32
    return %c0_i32, %c0_i32_0 : i32, i32
  }
  func.func @transform_3(%arg0: i32) -> (i32, i32, i32) {
    %c0_i32 = arith.constant 0 : i32
    %c0_i32_0 = arith.constant 0 : i32
    %c0_i32_1 = arith.constant 0 : i32
    return %arg0, %c0_i32, %c0_i32_0 : i32, i32, i32
  }
  func.func @transform_4(%arg0: i32) -> (i32, i32, i32) {
    %c0_i32 = arith.constant 0 : i32
    %c0_i32_0 = arith.constant 0 : i32
    %c0_i32_1 = arith.constant 0 : i32
    return %arg0, %c0_i32, %c0_i32_0 : i32, i32, i32
  }
  func.func @transform_5(%arg0: i32) -> (i32, i32, i32) {
    %c0_i32 = arith.constant 0 : i32
    %c0_i32_0 = arith.constant 0 : i32
    %c0_i32_1 = arith.constant 0 : i32
    return %arg0, %c0_i32, %c0_i32_0 : i32, i32, i32
  }
}

module attributes {stable_mosaic.version = 11 : i64} {
  func.func @bn_kernel(%arg0: i32, %arg1: memref<1x8x128xf32, #tpu.memory_space<vmem>>, %arg2: memref<1x8x1xf32, #tpu.memory_space<vmem>>, %arg3: memref<1x8x1xf32, #tpu.memory_space<vmem>>, %arg4: memref<1x8x128xf32, #tpu.memory_space<vmem>>) attributes {dimension_semantics = [#tpu.dimension_semantics<parallel>], iteration_bounds = array<i64: 2>, scalar_prefetch = 0 : i64, scratch_operands = 0 : i64, tpu.core_type = #tpu.core_type<tc>, window_params = [{transform_indices = @transform_0, window_bounds = array<i64: 1, 8, 128>}, {pipeline_mode = #tpu.pipeline_mode<synchronous>, transform_indices = @transform_1, window_bounds = array<i64: 1, 8, 1>}, {pipeline_mode = #tpu.pipeline_mode<synchronous>, transform_indices = @transform_2, window_bounds = array<i64: 1, 8, 1>}, {transform_indices = @transform_3, window_bounds = array<i64: 1, 8, 128>}]} {
    %c0 = arith.constant 0 : index
    %c0_0 = arith.constant 0 : index
    %c0_1 = arith.constant 0 : index
    %0 = vector.load %arg1[%c0, %c0_0, %c0_1] : memref<1x8x128xf32, #tpu.memory_space<vmem>>, vector<1x8x128xf32>
    %c0_2 = arith.constant 0 : index
    %c0_3 = arith.constant 0 : index
    %c0_4 = arith.constant 0 : index
    %1 = vector.load %arg2[%c0_2, %c0_3, %c0_4] : memref<1x8x1xf32, #tpu.memory_space<vmem>>, vector<1x8x1xf32>
    %2 = vector.broadcast %1 : vector<1x8x1xf32> to vector<1x8x128xf32>
    %3 = arith.mulf %0, %2 : vector<1x8x128xf32>
    %c0_5 = arith.constant 0 : index
    %c0_6 = arith.constant 0 : index
    %c0_7 = arith.constant 0 : index
    %4 = vector.load %arg3[%c0_5, %c0_6, %c0_7] : memref<1x8x1xf32, #tpu.memory_space<vmem>>, vector<1x8x1xf32>
    %5 = vector.broadcast %4 : vector<1x8x1xf32> to vector<1x8x128xf32>
    %6 = arith.addf %3, %5 : vector<1x8x128xf32>
    %c0_8 = arith.constant 0 : index
    %c0_9 = arith.constant 0 : index
    %c0_10 = arith.constant 0 : index
    %7 = vector.load %arg4[%c0_8, %c0_9, %c0_10] : memref<1x8x128xf32, #tpu.memory_space<vmem>>, vector<1x8x128xf32>
    tpu.vector_store %arg4[%c0_8, %c0_9, %c0_10], %6 {strides = array<i32>} : memref<1x8x128xf32, #tpu.memory_space<vmem>>, vector<1x8x128xf32>,
    return
  }
  func.func @transform_0(%arg0: i32) -> (i32, i32, i32) {
    %c0_i32 = arith.constant 0 : i32
    %c0_i32_0 = arith.constant 0 : i32
    %c0_i32_1 = arith.constant 0 : i32
    return %arg0, %c0_i32, %c0_i32_0 : i32, i32, i32
  }
  func.func @transform_1(%arg0: i32) -> (i32, i32, i32) {
    %c0_i32 = arith.constant 0 : i32
    %c0_i32_0 = arith.constant 0 : i32
    %c0_i32_1 = arith.constant 0 : i32
    %c0_i32_2 = arith.constant 0 : i32
    return %c0_i32, %c0_i32_0, %c0_i32_1 : i32, i32, i32
  }
  func.func @transform_2(%arg0: i32) -> (i32, i32, i32) {
    %c0_i32 = arith.constant 0 : i32
    %c0_i32_0 = arith.constant 0 : i32
    %c0_i32_1 = arith.constant 0 : i32
    %c0_i32_2 = arith.constant 0 : i32
    return %c0_i32, %c0_i32_0, %c0_i32_1 : i32, i32, i32
  }
  func.func @transform_3(%arg0: i32) -> (i32, i32, i32) {
    %c0_i32 = arith.constant 0 : i32
    %c0_i32_0 = arith.constant 0 : i32
    %c0_i32_1 = arith.constant 0 : i32
    return %arg0, %c0_i32, %c0_i32_0 : i32, i32, i32
  }
}

</mosaic_0001>

<llo_original>
// kernel: conv2d_layer.3
$region0: #{conv2d_layer.3}
  #allocation0 [shape = 'u32[]', space=smem, size = 0x4, offset = 0x4, fixed_abs, tag = 'smem constant byte address 0x4 - core index']
  #allocation1 [shape = 'u32[144,128]{1,0:T(1,128)}', space=vmem, size = 0x12000, scoped, tag = 'internal scratch']
  %s0 = inlined_call_operand.vmem [shape: f32[2,8,128], index: 0, kind: input, shape index: {}, may-alias: {0,3}]
  %s1 = inlined_call_operand.vmem [shape: f32[1,8,1], index: 1, kind: input, shape index: {}]
  %s2 = inlined_call_operand.vmem [shape: f32[1,8,1], index: 2, kind: input, shape index: {}]
  %s3 = inlined_call_operand.vmem [shape: f32[2,8,128], index: 3, kind: output, shape index: {}, may-alias: {0,3}]
  %s4 = sld [smem:[#allocation0]]
  $region45: #{conv2d_layer.3} parent=0
    _
  %s6 = ssub.s32 1, %s4
  %s7 = scalar_select 0, %s6, %s4
  loop: start=0, step=1, limit=4
  $region2: #{conv2d_layer.3} parent=0 // loop_pre_header
    _
  $region3: #{conv2d_layer.3} parent=0 // loop_header
    %s9 = sphi 0, %s13
    %p10 = scmp.ge.s32.totalorder %s9, 4
    %s19 = sphi 0, %s21
    %s22 = sphi 0, %s19
    %s23 = sphi 0, %s22
    %s39 = sphi 0, %s23
    %s43 = sphi 0, %s43
    %s45 = sphi 0, %s43
    %s46 = sphi 0, %s45
    %s60 = sphi 0, %s46
    %s64 = sphi 0, %s64
    %s66 = sphi 0, %s64
    %s67 = sphi 0, %s66
    %s81 = sphi 0, %s67
    %s87 = sphi 0, %s89
    %s90 = sphi 0, %s87
    %s91 = sphi 0, %s90
    %s107 = sphi 0, %s91
  $region4: #{conv2d_layer.3} parent=0 // loop_header_branch
    %12 = sbr.rel (%p10) target = $region8
  $region5: #{conv2d_layer.3} parent=0 // loop_body
    %s14 = ssub.s32 %s9, 1
    %s15 = ssub.s32 %s9, 2
    %s16 = sadd.s32 %s9, 1
    %s17 = ssub.s32 %s9, %s16
    %p18 = scmp.eq.s32.totalorder %s17, 0
    %s20 = sadd.s32 %s19, 1
    %s21 = scalar_select %p18, %s19, %s20
    %p24 = pneg %p18
    %p25 = scmp.eq.s32.totalorder %s9, 1
    %p26 = por %p24, %p25
    %p27 = scmp.ne.s32.totalorder %s19, %s22
    %p28 = scmp.eq.s32.totalorder %s9, 0
    %p29 = por %p27, %p28
    %p30 = scmp.ne.s32.totalorder %s19, %s22
    %p31 = scmp.eq.s32.totalorder %s14, 1
    %p32 = por %p30, %p31
    %p33 = scmp.ne.s32.totalorder %s22, %s23
    %p34 = scmp.eq.s32.totalorder %s14, 0
    %p35 = por %p33, %p34
    %p36 = scmp.ne.s32.totalorder %s22, %s23
    %p37 = scmp.eq.s32.totalorder %s15, 1
    %p38 = por %p36, %p37
    %p40 = scmp.ne.s32.totalorder %s23, %s39
    %p41 = scmp.eq.s32.totalorder %s15, 0
    %p42 = por %p40, %p41
    %s44 = sadd.s32 %s43, 1
    %p47 = scmp.eq.s32.totalorder %s9, 1
    %p48 = scmp.ne.s32.totalorder %s43, %s45
    %p49 = scmp.eq.s32.totalorder %s9, 0
    %p50 = por %p48, %p49
    %p51 = scmp.ne.s32.totalorder %s43, %s45
    %p52 = scmp.eq.s32.totalorder %s14, 1
    %p53 = por %p51, %p52
    %p54 = scmp.ne.s32.totalorder %s45, %s46
    %p55 = scmp.eq.s32.totalorder %s14, 0
    %p56 = por %p54, %p55
    %p57 = scmp.ne.s32.totalorder %s45, %s46
    %p58 = scmp.eq.s32.totalorder %s15, 1
    %p59 = por %p57, %p58
    %p61 = scmp.ne.s32.totalorder %s46, %s60
    %p62 = scmp.eq.s32.totalorder %s15, 0
    %p63 = por %p61, %p62
    %s65 = sadd.s32 %s64, 1
    %p68 = scmp.eq.s32.totalorder %s9, 1
    %p69 = scmp.ne.s32.totalorder %s64, %s66
    %p70 = scmp.eq.s32.totalorder %s9, 0
    %p71 = por %p69, %p70
    %p72 = scmp.ne.s32.totalorder %s64, %s66
    %p73 = scmp.eq.s32.totalorder %s14, 1
    %p74 = por %p72, %p73
    %p75 = scmp.ne.s32.totalorder %s66, %s67
    %p76 = scmp.eq.s32.totalorder %s14, 0
    %p77 = por %p75, %p76
    %p78 = scmp.ne.s32.totalorder %s66, %s67
    %p79 = scmp.eq.s32.totalorder %s15, 1
    %p80 = por %p78, %p79
    %p82 = scmp.ne.s32.totalorder %s67, %s81
    %p83 = scmp.eq.s32.totalorder %s15, 0
    %p84 = por %p82, %p83
    %s85 = ssub.s32 %s9, %s16
    %p86 = scmp.eq.s32.totalorder %s85, 0
    %s88 = sadd.s32 %s87, 1
    %s89 = scalar_select %p86, %s87, %s88
    %p92 = pneg %p86
    %p93 = scmp.eq.s32.totalorder %s9, 1
    %p94 = por %p92, %p93
    %p95 = scmp.ne.s32.totalorder %s87, %s90
    %p96 = scmp.eq.s32.totalorder %s9, 0
    %p97 = por %p95, %p96
    %p98 = scmp.ne.s32.totalorder %s87, %s90
    %p99 = scmp.eq.s32.totalorder %s14, 1
    %p100 = por %p98, %p99
    %p101 = scmp.ne.s32.totalorder %s90, %s91
    %p102 = scmp.eq.s32.totalorder %s14, 0
    %p103 = por %p101, %p102
    %p104 = scmp.ne.s32.totalorder %s90, %s91
    %p105 = scmp.eq.s32.totalorder %s15, 1
    %p106 = por %p104, %p105
    %p108 = scmp.ne.s32.totalorder %s91, %s107
    %p109 = scmp.eq.s32.totalorder %s15, 0
    %p110 = por %p108, %p109
    %p111 = scmp.le.s32.totalorder 1, %s9
    %p112 = scmp.lt.s32.totalorder %s9, 3
    %p113 = pnand %p111, %p112
    %p114 = pneg %p113
    // Predicated region
    $region9: #{conv2d_layer.3} parent=5 // pred_check
      _
    $region10: #{conv2d_layer.3} parent=5 // pred_check_branch
      %116 = sbr.rel (%p113) target = $region12
    $region11: #{conv2d_layer.3} parent=5 // pred_region
      %s117 = ssub.s32 %s9, 1
      // Predicated region
      $region13: #{conv2d_layer.3} parent=11 // pred_check
        %p118 = pneg %p56
      $region14: #{conv2d_layer.3} parent=11 // pred_check_branch
        %120 = sbr.rel (%p118) target = $region16
      $region15: #{conv2d_layer.3} parent=11 // pred_region
        _
      $region16: #{conv2d_layer.3} parent=11 // pred_fallthru
        _
      // Predicated region
      $region17: #{conv2d_layer.3} parent=11 // pred_check
        %p121 = pneg %p77
      $region18: #{conv2d_layer.3} parent=11 // pred_check_branch
        %123 = sbr.rel (%p121) target = $region20
      $region19: #{conv2d_layer.3} parent=11 // pred_region
        _
      $region20: #{conv2d_layer.3} parent=11 // pred_fallthru
        _
    $region12: #{conv2d_layer.3} parent=5 // pred_fallthru
      _
    %p124 = scmp.lt.s32.totalorder %s9, 2
    // Predicated region
    $region21: #{conv2d_layer.3} parent=5 // pred_check
      %p125 = pneg %p124
    $region22: #{conv2d_layer.3} parent=5 // pred_check_branch
      %127 = sbr.rel (%p125) target = $region24
    $region23: #{conv2d_layer.3} parent=5 // pred_region
      // Predicated region
      $region25: #{conv2d_layer.3} parent=23 // pred_check
        %p128 = pneg %p29
      $region26: #{conv2d_layer.3} parent=23 // pred_check_branch
        %130 = sbr.rel (%p128) target = $region28
      $region27: #{conv2d_layer.3} parent=23 // pred_region
        %p131 = scmp.lt.s32.totalorder %s9, 1
        %s132 = scalar_select %p131, %s9, 1
        %s133 = smul.addr %s132, 8
        %s134 = scalar_lea.vmem %s0, %s133
      $region28: #{conv2d_layer.3} parent=23 // pred_fallthru
        _
    $region24: #{conv2d_layer.3} parent=5 // pred_fallthru
      _
    %p135 = scmp.le.s32.totalorder 1, %s9
    %p136 = scmp.lt.s32.totalorder %s9, 3
    %p137 = pnand %p135, %p136
    %p138 = pneg %p137
    // Predicated region
    $region29: #{conv2d_layer.3} parent=5 // pred_check
      _
    $region30: #{conv2d_layer.3} parent=5 // pred_check_branch
      %140 = sbr.rel (%p137) target = $region32
    $region31: #{conv2d_layer.3} parent=5 // pred_region
      %s141 = ssub.s32 %s9, 1
      %p142 = scmp.lt.s32.totalorder %s14, 1
      %s143 = scalar_select %p142, %s14, 1
      %s144 = smul.addr %s143, 8
      %s145 = scalar_lea.vmem %s0, %s144
      %p146 = pneg %p35
      %p147 = pneg %p32
      %p148 = pneg %p56
      %p149 = pneg %p53
      %p150 = pneg %p77
      %p151 = pneg %p74
      %p152 = pneg %p103
      %p153 = pneg %p100
      %p154 = scmp.lt.s32.totalorder %s14, 1
      %s155 = scalar_select %p154, %s14, 1
      %s156 = smul.addr %s155, 8
      %s157 = scalar_lea.vmem %s3, %s156
      %p158 = scmp.lt.s32.totalorder %s14, 1
      %s159 = scalar_select %p158, %s14, 1
      %s160 = smul.addr %s159, 8
      %s161 = scalar_lea.vmem %s0, %s160
      %p162 = scmp.lt.s32.totalorder %s14, 1
      %s163 = scalar_select %p162, %s14, 1
      %s164 = smul.addr %s163, 8
      %s165 = scalar_lea.vmem %s3, %s164
      %v166 = vld [vmem:[%s161] sm:$0xff]
      %v167 = vld [vmem:[%s1] sm:$0xff]
      %169 = vset.pattern.permute.xlu0 0
      %170 = vperm.xlu0 %169, %v167
      %v171 = vpop.permute.xlu0 %170
      %v173 = vmul.f32 %v166, %v171
      %v174 = vld [vmem:[%s2] sm:$0xff]
      %176 = vset.pattern.permute.xlu0 0
      %177 = vperm.xlu0 %176, %v174
      %v178 = vpop.permute.xlu0 %177
      %v180 = vadd.f32 %v173, %v178
      %181 = vst [vmem:[%s165] sm:$0xff] %v180
      %p182 = scmp.lt.s32.totalorder %s14, 1
      %s183 = scalar_select %p182, %s14, 1
      %s184 = smul.addr %s183, 8
      %s185 = scalar_lea.vmem %s3, %s184
      // Predicated region
      $region33: #{conv2d_layer.3} parent=31 // pred_check
        %p186 = pneg %p100
      $region34: #{conv2d_layer.3} parent=31 // pred_check_branch
        %188 = sbr.rel (%p186) target = $region36
      $region35: #{conv2d_layer.3} parent=31 // pred_region
        _
      $region36: #{conv2d_layer.3} parent=31 // pred_fallthru
        _
    $region32: #{conv2d_layer.3} parent=5 // pred_fallthru
      _
    %p189 = scmp.le.s32.totalorder 2, %s9
    // Predicated region
    $region37: #{conv2d_layer.3} parent=5 // pred_check
      %p190 = pneg %p189
    $region38: #{conv2d_layer.3} parent=5 // pred_check_branch
      %192 = sbr.rel (%p190) target = $region40
    $region39: #{conv2d_layer.3} parent=5 // pred_region
      %s193 = ssub.s32 %s9, 2
      // Predicated region
      $region41: #{conv2d_layer.3} parent=39 // pred_check
        %p194 = pneg %p106
      $region42: #{conv2d_layer.3} parent=39 // pred_check_branch
        %196 = sbr.rel (%p194) target = $region44
      $region43: #{conv2d_layer.3} parent=39 // pred_region
        %p197 = scmp.lt.s32.totalorder %s15, 1
        %s198 = scalar_select %p197, %s15, 1
        %s199 = smul.addr %s198, 8
        %s200 = scalar_lea.vmem %s3, %s199
      $region44: #{conv2d_layer.3} parent=39 // pred_fallthru
        _
    $region40: #{conv2d_layer.3} parent=5 // pred_fallthru
      _
  $region6: #{conv2d_layer.3} parent=0 // loop_footer
    %s13 = sadd.s32 1, %s9
  $region7: #{conv2d_layer.3} parent=0 // loop_footer_branch
    %8 = sbr.rel target = $region3
  $region8: #{conv2d_layer.3} parent=0 // loop_exit
    _

// kernel: conv2d_layer.2
$region0: #{conv2d_layer.2}
  #allocation0 [shape = 'u32[]', space=smem, size = 0x4, offset = 0x4, fixed_abs, tag = 'smem constant byte address 0x4 - core index']
  #allocation1 [shape = 'u32[144,128]{1,0:T(1,128)}', space=vmem, size = 0x12000, scoped, tag = 'internal scratch']
  %s0 = inlined_call_operand.vmem [shape: f32[2,16,256], index: 0, kind: input, shape index: {}]
  %s1 = inlined_call_operand.vmem [shape: f32[4,8,16], index: 1, kind: input, shape index: {}]
  %s2 = inlined_call_operand.vmem [shape: f32[1,128], index: 2, kind: input, shape index: {}]
  %s3 = inlined_call_operand.vmem [shape: f32[2,8,128], index: 3, kind: output, shape index: {0}]
  %s4 = inlined_call_operand.vmem [shape: f32[2,8,1], index: 4, kind: output, shape index: {1}]
  %s5 = inlined_call_operand.vmem [shape: f32[2,8,1], index: 5, kind: output, shape index: {2}]
  %6 = xla_tuple %s3, %s4, %s5
  %s7 = sld [smem:[#allocation0]]
  $region61: #{conv2d_layer.2} parent=0
    _
  %s9 = ssub.s32 1, %s7
  %s10 = scalar_select 0, %s9, %s7
  loop: start=0, step=1, limit=4
  $region2: #{conv2d_layer.2} parent=0 // loop_pre_header
    _
  $region3: #{conv2d_layer.2} parent=0 // loop_header
    %s12 = sphi 0, %s16
    %p13 = scmp.ge.s32.totalorder %s12, 4
    %s22 = sphi 0, %s24
    %s25 = sphi 0, %s22
    %s26 = sphi 0, %s25
    %s42 = sphi 0, %s26
    %s46 = sphi 0, %s46
    %s48 = sphi 0, %s46
    %s49 = sphi 0, %s48
    %s63 = sphi 0, %s49
    %s67 = sphi 0, %s67
    %s69 = sphi 0, %s67
    %s70 = sphi 0, %s69
    %s84 = sphi 0, %s70
    %s90 = sphi 0, %s92
    %s93 = sphi 0, %s90
    %s94 = sphi 0, %s93
    %s110 = sphi 0, %s94
    %s116 = sphi 0, %s118
    %s119 = sphi 0, %s116
    %s120 = sphi 0, %s119
    %s136 = sphi 0, %s120
    %s142 = sphi 0, %s144
    %s145 = sphi 0, %s142
    %s146 = sphi 0, %s145
    %s162 = sphi 0, %s146
  $region4: #{conv2d_layer.2} parent=0 // loop_header_branch
    %15 = sbr.rel (%p13) target = $region8
  $region5: #{conv2d_layer.2} parent=0 // loop_body
    %s17 = ssub.s32 %s12, 1
    %s18 = ssub.s32 %s12, 2
    %s19 = sadd.s32 %s12, 1
    %s20 = ssub.s32 %s12, %s19
    %p21 = scmp.eq.s32.totalorder %s20, 0
    %s23 = sadd.s32 %s22, 1
    %s24 = scalar_select %p21, %s22, %s23
    %p27 = pneg %p21
    %p28 = scmp.eq.s32.totalorder %s12, 1
    %p29 = por %p27, %p28
    %p30 = scmp.ne.s32.totalorder %s22, %s25
    %p31 = scmp.eq.s32.totalorder %s12, 0
    %p32 = por %p30, %p31
    %p33 = scmp.ne.s32.totalorder %s22, %s25
    %p34 = scmp.eq.s32.totalorder %s17, 1
    %p35 = por %p33, %p34
    %p36 = scmp.ne.s32.totalorder %s25, %s26
    %p37 = scmp.eq.s32.totalorder %s17, 0
    %p38 = por %p36, %p37
    %p39 = scmp.ne.s32.totalorder %s25, %s26
    %p40 = scmp.eq.s32.totalorder %s18, 1
    %p41 = por %p39, %p40
    %p43 = scmp.ne.s32.totalorder %s26, %s42
    %p44 = scmp.eq.s32.totalorder %s18, 0
    %p45 = por %p43, %p44
    %s47 = sadd.s32 %s46, 1
    %p50 = scmp.eq.s32.totalorder %s12, 1
    %p51 = scmp.ne.s32.totalorder %s46, %s48
    %p52 = scmp.eq.s32.totalorder %s12, 0
    %p53 = por %p51, %p52
    %p54 = scmp.ne.s32.totalorder %s46, %s48
    %p55 = scmp.eq.s32.totalorder %s17, 1
    %p56 = por %p54, %p55
    %p57 = scmp.ne.s32.totalorder %s48, %s49
    %p58 = scmp.eq.s32.totalorder %s17, 0
    %p59 = por %p57, %p58
    %p60 = scmp.ne.s32.totalorder %s48, %s49
    %p61 = scmp.eq.s32.totalorder %s18, 1
    %p62 = por %p60, %p61
    %p64 = scmp.ne.s32.totalorder %s49, %s63
    %p65 = scmp.eq.s32.totalorder %s18, 0
    %p66 = por %p64, %p65
    %s68 = sadd.s32 %s67, 1
    %p71 = scmp.eq.s32.totalorder %s12, 1
    %p72 = scmp.ne.s32.totalorder %s67, %s69
    %p73 = scmp.eq.s32.totalorder %s12, 0
    %p74 = por %p72, %p73
    %p75 = scmp.ne.s32.totalorder %s67, %s69
    %p76 = scmp.eq.s32.totalorder %s17, 1
    %p77 = por %p75, %p76
    %p78 = scmp.ne.s32.totalorder %s69, %s70
    %p79 = scmp.eq.s32.totalorder %s17, 0
    %p80 = por %p78, %p79
    %p81 = scmp.ne.s32.totalorder %s69, %s70
    %p82 = scmp.eq.s32.totalorder %s18, 1
    %p83 = por %p81, %p82
    %p85 = scmp.ne.s32.totalorder %s70, %s84
    %p86 = scmp.eq.s32.totalorder %s18, 0
    %p87 = por %p85, %p86
    %s88 = ssub.s32 %s12, %s19
    %p89 = scmp.eq.s32.totalorder %s88, 0
    %s91 = sadd.s32 %s90, 1
    %s92 = scalar_select %p89, %s90, %s91
    %p95 = pneg %p89
    %p96 = scmp.eq.s32.totalorder %s12, 1
    %p97 = por %p95, %p96
    %p98 = scmp.ne.s32.totalorder %s90, %s93
    %p99 = scmp.eq.s32.totalorder %s12, 0
    %p100 = por %p98, %p99
    %p101 = scmp.ne.s32.totalorder %s90, %s93
    %p102 = scmp.eq.s32.totalorder %s17, 1
    %p103 = por %p101, %p102
    %p104 = scmp.ne.s32.totalorder %s93, %s94
    %p105 = scmp.eq.s32.totalorder %s17, 0
    %p106 = por %p104, %p105
    %p107 = scmp.ne.s32.totalorder %s93, %s94
    %p108 = scmp.eq.s32.totalorder %s18, 1
    %p109 = por %p107, %p108
    %p111 = scmp.ne.s32.totalorder %s94, %s110
    %p112 = scmp.eq.s32.totalorder %s18, 0
    %p113 = por %p111, %p112
    %s114 = ssub.s32 %s12, %s19
    %p115 = scmp.eq.s32.totalorder %s114, 0
    %s117 = sadd.s32 %s116, 1
    %s118 = scalar_select %p115, %s116, %s117
    %p121 = pneg %p115
    %p122 = scmp.eq.s32.totalorder %s12, 1
    %p123 = por %p121, %p122
    %p124 = scmp.ne.s32.totalorder %s116, %s119
    %p125 = scmp.eq.s32.totalorder %s12, 0
    %p126 = por %p124, %p125
    %p127 = scmp.ne.s32.totalorder %s116, %s119
    %p128 = scmp.eq.s32.totalorder %s17, 1
    %p129 = por %p127, %p128
    %p130 = scmp.ne.s32.totalorder %s119, %s120
    %p131 = scmp.eq.s32.totalorder %s17, 0
    %p132 = por %p130, %p131
    %p133 = scmp.ne.s32.totalorder %s119, %s120
    %p134 = scmp.eq.s32.totalorder %s18, 1
    %p135 = por %p133, %p134
    %p137 = scmp.ne.s32.totalorder %s120, %s136
    %p138 = scmp.eq.s32.totalorder %s18, 0
    %p139 = por %p137, %p138
    %s140 = ssub.s32 %s12, %s19
    %p141 = scmp.eq.s32.totalorder %s140, 0
    %s143 = sadd.s32 %s142, 1
    %s144 = scalar_select %p141, %s142, %s143
    %p147 = pneg %p141
    %p148 = scmp.eq.s32.totalorder %s12, 1
    %p149 = por %p147, %p148
    %p150 = scmp.ne.s32.totalorder %s142, %s145
    %p151 = scmp.eq.s32.totalorder %s12, 0
    %p152 = por %p150, %p151
    %p153 = scmp.ne.s32.totalorder %s142, %s145
    %p154 = scmp.eq.s32.totalorder %s17, 1
    %p155 = por %p153, %p154
    %p156 = scmp.ne.s32.totalorder %s145, %s146
    %p157 = scmp.eq.s32.totalorder %s17, 0
    %p158 = por %p156, %p157
    %p159 = scmp.ne.s32.totalorder %s145, %s146
    %p160 = scmp.eq.s32.totalorder %s18, 1
    %p161 = por %p159, %p160
    %p163 = scmp.ne.s32.totalorder %s146, %s162
    %p164 = scmp.eq.s32.totalorder %s18, 0
    %p165 = por %p163, %p164
    %p166 = scmp.le.s32.totalorder 1, %s12
    %p167 = scmp.lt.s32.totalorder %s12, 3
    %p168 = pnand %p166, %p167
    %p169 = pneg %p168
    // Predicated region
    $region9: #{conv2d_layer.2} parent=5 // pred_check
      _
    $region10: #{conv2d_layer.2} parent=5 // pred_check_branch
      %171 = sbr.rel (%p168) target = $region12
    $region11: #{conv2d_layer.2} parent=5 // pred_region
      %s172 = ssub.s32 %s12, 1
      // Predicated region
      $region13: #{conv2d_layer.2} parent=11 // pred_check
        %p173 = pneg %p59
      $region14: #{conv2d_layer.2} parent=11 // pred_check_branch
        %175 = sbr.rel (%p173) target = $region16
      $region15: #{conv2d_layer.2} parent=11 // pred_region
        _
      $region16: #{conv2d_layer.2} parent=11 // pred_fallthru
        _
      // Predicated region
      $region17: #{conv2d_layer.2} parent=11 // pred_check
        %p176 = pneg %p80
      $region18: #{conv2d_layer.2} parent=11 // pred_check_branch
        %178 = sbr.rel (%p176) target = $region20
      $region19: #{conv2d_layer.2} parent=11 // pred_region
        _
      $region20: #{conv2d_layer.2} parent=11 // pred_fallthru
        _
    $region12: #{conv2d_layer.2} parent=5 // pred_fallthru
      _
    %p179 = scmp.lt.s32.totalorder %s12, 2
    // Predicated region
    $region21: #{conv2d_layer.2} parent=5 // pred_check
      %p180 = pneg %p179
    $region22: #{conv2d_layer.2} parent=5 // pred_check_branch
      %182 = sbr.rel (%p180) target = $region24
    $region23: #{conv2d_layer.2} parent=5 // pred_region
      // Predicated region
      $region25: #{conv2d_layer.2} parent=23 // pred_check
        %p183 = pneg %p32
      $region26: #{conv2d_layer.2} parent=23 // pred_check_branch
        %185 = sbr.rel (%p183) target = $region28
      $region27: #{conv2d_layer.2} parent=23 // pred_region
        %p186 = scmp.lt.s32.totalorder %s12, 1
        %s187 = scalar_select %p186, %s12, 1
        %s188 = smul.addr %s187, 4
        %s189 = smul.addr %s188, 8
        %s190 = scalar_lea.vmem %s0, %s189
      $region28: #{conv2d_layer.2} parent=23 // pred_fallthru
        _
    $region24: #{conv2d_layer.2} parent=5 // pred_fallthru
      _
    %p191 = scmp.le.s32.totalorder 1, %s12
    %p192 = scmp.lt.s32.totalorder %s12, 3
    %p193 = pnand %p191, %p192
    %p194 = pneg %p193
    // Predicated region
    $region29: #{conv2d_layer.2} parent=5 // pred_check
      _
    $region30: #{conv2d_layer.2} parent=5 // pred_check_branch
      %196 = sbr.rel (%p193) target = $region32
    $region31: #{conv2d_layer.2} parent=5 // pred_region
      %s197 = ssub.s32 %s12, 1
      %p198 = scmp.lt.s32.totalorder %s17, 1
      %s199 = scalar_select %p198, %s17, 1
      %s200 = smul.addr %s199, 4
      %s201 = smul.addr %s200, 8
      %s202 = scalar_lea.vmem %s0, %s201
      %p203 = pneg %p38
      %p204 = pneg %p35
      %p205 = pneg %p59
      %p206 = pneg %p56
      %p207 = pneg %p80
      %p208 = pneg %p77
      %p209 = pneg %p106
      %p210 = pneg %p103
      %p211 = scmp.lt.s32.totalorder %s17, 1
      %s212 = scalar_select %p211, %s17, 1
      %s213 = smul.addr %s212, 8
      %s214 = scalar_lea.vmem %s3, %s213
      %p215 = pneg %p132
      %p216 = pneg %p129
      %p217 = scmp.lt.s32.totalorder %s17, 1
      %s218 = scalar_select %p217, %s17, 1
      %s219 = smul.addr %s218, 8
      %s220 = scalar_lea.vmem %s4, %s219
      %p221 = pneg %p158
      %p222 = pneg %p155
      %p223 = scmp.lt.s32.totalorder %s17, 1
      %s224 = scalar_select %p223, %s17, 1
      %s225 = smul.addr %s224, 8
      %s226 = scalar_lea.vmem %s5, %s225
      %p227 = scmp.lt.s32.totalorder %s17, 1
      %s228 = scalar_select %p227, %s17, 1
      %s229 = smul.addr %s228, 4
      %s230 = smul.addr %s229, 8
      %s231 = scalar_lea.vmem %s0, %s230
      %p232 = scmp.lt.s32.totalorder %s17, 1
      %s233 = scalar_select %p232, %s17, 1
      %s234 = smul.addr %s233, 8
      %s235 = scalar_lea.vmem %s3, %s234
      %p236 = scmp.lt.s32.totalorder %s17, 1
      %s237 = scalar_select %p236, %s17, 1
      %s238 = smul.addr %s237, 8
      %s239 = scalar_lea.vmem %s4, %s238
      %p240 = scmp.lt.s32.totalorder %s17, 1
      %s241 = scalar_select %p240, %s17, 1
      %s242 = smul.addr %s241, 8
      %s243 = scalar_lea.vmem %s5, %s242
      %v244 = vld [vmem:[%s2] sm:$0x1]
      %v245 = vld [vmem:[%s231] sm:$0xff]
      %v246 = vld [vmem:[%s231 + $0x10] sm:$0xff]
      %vm247 = vcmp.ge.f32.partialorder %v245, 0.0
      %vm248 = vcmp.ge.f32.partialorder %v246, 0.0
      %v249 = vmul.f32 %v245, 0.2
      %v250 = vmul.f32 %v246, 0.2
      %v251 = vsel %vm247, %v245, %v249
      %v252 = vsel %vm248, %v246, %v250
      %v253 = vld [vmem:[%s1] sm:$0xff]
      %v254 = vld [vmem:[%s231] sm:$0xff]
      %v255 = vld [vmem:[%s231 + $0x8] sm:$0xff]
      %v256 = vld [vmem:[%s231 + $0x10] sm:$0xff]
      %v257 = vld [vmem:[%s231 + $0x18] sm:$0xff]
      %vm258 = vcmp.ge.f32.partialorder %v254, 0.0
      %vm259 = vcmp.ge.f32.partialorder %v255, 0.0
      %vm260 = vcmp.ge.f32.partialorder %v256, 0.0
      %vm261 = vcmp.ge.f32.partialorder %v257, 0.0
      %v262 = vmul.f32 %v254, 0.2
      %v263 = vmul.f32 %v255, 0.2
      %v264 = vmul.f32 %v256, 0.2
      %v265 = vmul.f32 %v257, 0.2
      %v266 = vsel %vm258, %v254, %v262
      %v267 = vsel %vm259, %v255, %v263
      %v268 = vsel %vm260, %v256, %v264
      %v269 = vsel %vm261, %v257, %v265
      %s270 = scalar_lea.vmem %s1, 8
      %v271 = vld [vmem:[%s270] sm:$0xff]
      %276 = vrot.lane.b32.xlu0 %v266, 127
      %v277 = vpop.permute.xlu0 %276
      %278 = vrot.lane.b32.xlu0 %v267, 127
      %v279 = vpop.permute.xlu0 %278
      %280 = vrot.lane.b32.xlu0 %v268, 127
      %v281 = vpop.permute.xlu0 %280
      %282 = vrot.lane.b32.xlu0 %v269, 127
      %v283 = vpop.permute.xlu0 %282
      %vm284 = vcmask 1039360
      %v285 = vsel %vm284, %v277, %v279
      %v286 = vsel %vm284, %v281, %v283
      %vm289 = vcmask 130048
      %v291 = vsel %vm289, %v271, 0
      %293 = vmatprep.subr.mxu0 0.0
      %294 = vmatpush1.msra.mxu0 %v285
      %295 = vmatprep.subr.mxu0 0.0
      %296 = vmatpush1.msra.mxu0 %v286
      %297 = vmatprep.subr.mxu0 0.0
      %298 = vmatpush1.msra.mxu0 0.0
      %299 = vmatprep.subr.mxu0 0.0
      %300 = vmatpush1.msra.mxu0 0.0
      %301 = vmatprep.subr.mxu0 0.0
      %302 = vmatpush1.msra.mxu0 0.0
      %303 = vmatprep.subr.mxu0 0.0
      %304 = vmatpush1.msra.mxu0 0.0
      %305 = vmatprep.subr.mxu0 0.0
      %306 = vmatpush1.msra.mxu0 0.0
      %307 = vmatprep.subr.mxu0 0.0
      %308 = vmatpush1.msra.mxu0 0.0
      %309 = vmatprep.subr.mxu0 0.0
      %310 = vmatpush1.msra.mxu0 0.0
      %311 = vmatprep.subr.mxu0 0.0
      %312 = vmatpush1.msra.mxu0 0.0
      %313 = vmatprep.subr.mxu0 0.0
      %314 = vmatpush1.msra.mxu0 0.0
      %315 = vmatprep.subr.mxu0 0.0
      %316 = vmatpush1.msra.mxu0 0.0
      %317 = vmatprep.subr.mxu0 0.0
      %318 = vmatpush1.msra.mxu0 0.0
      %319 = vmatprep.subr.mxu0 0.0
      %320 = vmatpush1.msra.mxu0 0.0
      %321 = vmatprep.subr.mxu0 0.0
      %322 = vmatpush1.msra.mxu0 0.0
      %323 = vmatprep.subr.mxu0 0.0
      %324 = vmatpush1.msra.mxu0 0.0
      %325 = vmatprep.subr.mxu0 0.0
      %326 = vmatpush1.msra.mxu0 0.0
      %327 = vmatprep.subr.mxu0 0.0
      %328 = vmatpush1.msra.mxu0 0.0
      %329 = vmatprep.subr.mxu0 0.0
      %330 = vmatpush1.msra.mxu0 0.0
      %331 = vmatprep.subr.mxu0 0.0
      %332 = vmatpush1.msra.mxu0 0.0
      %333 = vmatprep.subr.mxu0 0.0
      %334 = vmatpush1.msra.mxu0 0.0
      %335 = vmatprep.subr.mxu0 0.0
      %336 = vmatpush1.msra.mxu0 0.0
      %337 = vmatprep.subr.mxu0 0.0
      %338 = vmatpush1.msra.mxu0 0.0
      %339 = vmatprep.subr.mxu0 0.0
      %340 = vmatpush1.msra.mxu0 0.0
      %341 = vmatprep.subr.mxu0 0.0
      %342 = vmatpush1.msra.mxu0 0.0
      %343 = vmatprep.subr.mxu0 0.0
      %344 = vmatpush1.msra.mxu0 0.0
      %345 = vmatprep.subr.mxu0 0.0
      %346 = vmatpush1.msra.mxu0 0.0
      %347 = vmatprep.subr.mxu0 0.0
      %348 = vmatpush1.msra.mxu0 0.0
      %349 = vmatprep.subr.mxu0 0.0
      %350 = vmatpush1.msra.mxu0 0.0
      %351 = vmatprep.subr.mxu0 0.0
      %352 = vmatpush1.msra.mxu0 0.0
      %353 = vmatprep.subr.mxu0 0.0
      %354 = vmatpush1.msra.mxu0 0.0
      %355 = vmatprep.subr.mxu0 0.0
      %356 = vmatpush1.msra.mxu0 0.0
      %357 = vmatprep.mubr.f32.mxu0 0.0
      %358 = vmatmul.mubr.f32.gmra.mrb[0].mxu0 %v291
      %v359 = vpop.f32.mrb[0].mxu0
      %v360 = vadd.f32 0.0, %v359
      %v361 = vpop.f32.mrb[0].mxu0
      %362 = vdwg.mxu0
      %v364 = vsel %vm289, %v253, 0
      %366 = vmatprep.subr.mxu0 0.0
      %367 = vmatpush1.msra.mxu0 %v251
      %368 = vmatprep.subr.mxu0 0.0
      %369 = vmatpush1.msra.mxu0 %v252
      %370 = vmatprep.subr.mxu0 0.0
      %371 = vmatpush1.msra.mxu0 0.0
      %372 = vmatprep.subr.mxu0 0.0
      %373 = vmatpush1.msra.mxu0 0.0
      %374 = vmatprep.subr.mxu0 0.0
      %375 = vmatpush1.msra.mxu0 0.0
      %376 = vmatprep.subr.mxu0 0.0
      %377 = vmatpush1.msra.mxu0 0.0
      %378 = vmatprep.subr.mxu0 0.0
      %379 = vmatpush1.msra.mxu0 0.0
      %380 = vmatprep.subr.mxu0 0.0
      %381 = vmatpush1.msra.mxu0 0.0
      %382 = vmatprep.subr.mxu0 0.0
      %383 = vmatpush1.msra.mxu0 0.0
      %384 = vmatprep.subr.mxu0 0.0
      %385 = vmatpush1.msra.mxu0 0.0
      %386 = vmatprep.subr.mxu0 0.0
      %387 = vmatpush1.msra.mxu0 0.0
      %388 = vmatprep.subr.mxu0 0.0
      %389 = vmatpush1.msra.mxu0 0.0
      %390 = vmatprep.subr.mxu0 0.0
      %391 = vmatpush1.msra.mxu0 0.0
      %392 = vmatprep.subr.mxu0 0.0
      %393 = vmatpush1.msra.mxu0 0.0
      %394 = vmatprep.subr.mxu0 0.0
      %395 = vmatpush1.msra.mxu0 0.0
      %396 = vmatprep.subr.mxu0 0.0
      %397 = vmatpush1.msra.mxu0 0.0
      %398 = vmatprep.subr.mxu0 0.0
      %399 = vmatpush1.msra.mxu0 0.0
      %400 = vmatprep.subr.mxu0 0.0
      %401 = vmatpush1.msra.mxu0 0.0
      %402 = vmatprep.subr.mxu0 0.0
      %403 = vmatpush1.msra.mxu0 0.0
      %404 = vmatprep.subr.mxu0 0.0
      %405 = vmatpush1.msra.mxu0 0.0
      %406 = vmatprep.subr.mxu0 0.0
      %407 = vmatpush1.msra.mxu0 0.0
      %408 = vmatprep.subr.mxu0 0.0
      %409 = vmatpush1.msra.mxu0 0.0
      %410 = vmatprep.subr.mxu0 0.0
      %411 = vmatpush1.msra.mxu0 0.0
      %412 = vmatprep.subr.mxu0 0.0
      %413 = vmatpush1.msra.mxu0 0.0
      %414 = vmatprep.subr.mxu0 0.0
      %415 = vmatpush1.msra.mxu0 0.0
      %416 = vmatprep.subr.mxu0 0.0
      %417 = vmatpush1.msra.mxu0 0.0
      %418 = vmatprep.subr.mxu0 0.0
      %419 = vmatpush1.msra.mxu0 0.0
      %420 = vmatprep.subr.mxu0 0.0
      %421 = vmatpush1.msra.mxu0 0.0
      %422 = vmatprep.subr.mxu0 0.0
      %423 = vmatpush1.msra.mxu0 0.0
      %424 = vmatprep.subr.mxu0 0.0
      %425 = vmatpush1.msra.mxu0 0.0
      %426 = vmatprep.subr.mxu0 0.0
      %427 = vmatpush1.msra.mxu0 0.0
      %428 = vmatprep.subr.mxu0 0.0
      %429 = vmatpush1.msra.mxu0 0.0
      %430 = vmatprep.mubr.f32.mxu0 0.0
      %431 = vmatmul.mubr.f32.gmra.mrb[0].mxu0 %v364
      %v432 = vpop.f32.mrb[0].mxu0
      %v433 = vadd.f32 %v360, %v432
      %v434 = vpop.f32.mrb[0].mxu0
      %435 = vdwg.mxu0
      %s436 = scalar_lea.vmem %s1, 16
      %v437 = vld [vmem:[%s436] sm:$0xff]
      %438 = vrot.lane.b32.xlu0 %v266, 119
      %v439 = vpop.permute.xlu0 %438
      %440 = vrot.lane.b32.xlu0 %v267, 119
      %v441 = vpop.permute.xlu0 %440
      %442 = vrot.lane.b32.xlu0 %v268, 119
      %v443 = vpop.permute.xlu0 %442
      %444 = vrot.lane.b32.xlu0 %v269, 119
      %v445 = vpop.permute.xlu0 %444
      %vm446 = vcmask 973824
      %v447 = vsel %vm446, %v439, %v441
      %v448 = vsel %vm446, %v443, %v445
      %v452 = vsel %vm289, %v437, 0
      %454 = vmatprep.subr.mxu0 0.0
      %455 = vmatpush1.msra.mxu0 %v447
      %456 = vmatprep.subr.mxu0 0.0
      %457 = vmatpush1.msra.mxu0 %v448
      %458 = vmatprep.subr.mxu0 0.0
      %459 = vmatpush1.msra.mxu0 0.0
      %460 = vmatprep.subr.mxu0 0.0
      %461 = vmatpush1.msra.mxu0 0.0
      %462 = vmatprep.subr.mxu0 0.0
      %463 = vmatpush1.msra.mxu0 0.0
      %464 = vmatprep.subr.mxu0 0.0
      %465 = vmatpush1.msra.mxu0 0.0
      %466 = vmatprep.subr.mxu0 0.0
      %467 = vmatpush1.msra.mxu0 0.0
      %468 = vmatprep.subr.mxu0 0.0
      %469 = vmatpush1.msra.mxu0 0.0
      %470 = vmatprep.subr.mxu0 0.0
      %471 = vmatpush1.msra.mxu0 0.0
      %472 = vmatprep.subr.mxu0 0.0
      %473 = vmatpush1.msra.mxu0 0.0
      %474 = vmatprep.subr.mxu0 0.0
      %475 = vmatpush1.msra.mxu0 0.0
      %476 = vmatprep.subr.mxu0 0.0
      %477 = vmatpush1.msra.mxu0 0.0
      %478 = vmatprep.subr.mxu0 0.0
      %479 = vmatpush1.msra.mxu0 0.0
      %480 = vmatprep.subr.mxu0 0.0
      %481 = vmatpush1.msra.mxu0 0.0
      %482 = vmatprep.subr.mxu0 0.0
      %483 = vmatpush1.msra.mxu0 0.0
      %484 = vmatprep.subr.mxu0 0.0
      %485 = vmatpush1.msra.mxu0 0.0
      %486 = vmatprep.subr.mxu0 0.0
      %487 = vmatpush1.msra.mxu0 0.0
      %488 = vmatprep.subr.mxu0 0.0
      %489 = vmatpush1.msra.mxu0 0.0
      %490 = vmatprep.subr.mxu0 0.0
      %491 = vmatpush1.msra.mxu0 0.0
      %492 = vmatprep.subr.mxu0 0.0
      %493 = vmatpush1.msra.mxu0 0.0
      %494 = vmatprep.subr.mxu0 0.0
      %495 = vmatpush1.msra.mxu0 0.0
      %496 = vmatprep.subr.mxu0 0.0
      %497 = vmatpush1.msra.mxu0 0.0
      %498 = vmatprep.subr.mxu0 0.0
      %499 = vmatpush1.msra.mxu0 0.0
      %500 = vmatprep.subr.mxu0 0.0
      %501 = vmatpush1.msra.mxu0 0.0
      %502 = vmatprep.subr.mxu0 0.0
      %503 = vmatpush1.msra.mxu0 0.0
      %504 = vmatprep.subr.mxu0 0.0
      %505 = vmatpush1.msra.mxu0 0.0
      %506 = vmatprep.subr.mxu0 0.0
      %507 = vmatpush1.msra.mxu0 0.0
      %508 = vmatprep.subr.mxu0 0.0
      %509 = vmatpush1.msra.mxu0 0.0
      %510 = vmatprep.subr.mxu0 0.0
      %511 = vmatpush1.msra.mxu0 0.0
      %512 = vmatprep.subr.mxu0 0.0
      %513 = vmatpush1.msra.mxu0 0.0
      %514 = vmatprep.subr.mxu0 0.0
      %515 = vmatpush1.msra.mxu0 0.0
      %516 = vmatprep.subr.mxu0 0.0
      %517 = vmatpush1.msra.mxu0 0.0
      %518 = vmatprep.mubr.f32.mxu0 0.0
      %519 = vmatmul.mubr.f32.gmra.mrb[0].mxu0 %v452
      %v520 = vpop.f32.mrb[0].mxu0
      %v521 = vadd.f32 0.0, %v520
      %v522 = vpop.f32.mrb[0].mxu0
      %523 = vdwg.mxu0
      %v524 = vadd.f32 %v433, %v521
      %s525 = scalar_lea.vmem %s1, 24
      %v526 = vld [vmem:[%s525] sm:$0xff]
      %527 = vrot.lane.b32.xlu0 %v266, 118
      %v528 = vpop.permute.xlu0 %527
      %529 = vrot.lane.b32.xlu0 %v267, 118
      %v530 = vpop.permute.xlu0 %529
      %531 = vrot.lane.b32.xlu0 %v268, 118
      %v532 = vpop.permute.xlu0 %531
      %533 = vrot.lane.b32.xlu0 %v269, 118
      %v534 = vpop.permute.xlu0 %533
      %vm535 = vcmask 965632
      %v536 = vsel %vm535, %v528, %v530
      %v537 = vsel %vm535, %v532, %v534
      %v541 = vsel %vm289, %v526, 0
      %543 = vmatprep.subr.mxu0 0.0
      %544 = vmatpush1.msra.mxu0 %v536
      %545 = vmatprep.subr.mxu0 0.0
      %546 = vmatpush1.msra.mxu0 %v537
      %547 = vmatprep.subr.mxu0 0.0
      %548 = vmatpush1.msra.mxu0 0.0
      %549 = vmatprep.subr.mxu0 0.0
      %550 = vmatpush1.msra.mxu0 0.0
      %551 = vmatprep.subr.mxu0 0.0
      %552 = vmatpush1.msra.mxu0 0.0
      %553 = vmatprep.subr.mxu0 0.0
      %554 = vmatpush1.msra.mxu0 0.0
      %555 = vmatprep.subr.mxu0 0.0
      %556 = vmatpush1.msra.mxu0 0.0
      %557 = vmatprep.subr.mxu0 0.0
      %558 = vmatpush1.msra.mxu0 0.0
      %559 = vmatprep.subr.mxu0 0.0
      %560 = vmatpush1.msra.mxu0 0.0
      %561 = vmatprep.subr.mxu0 0.0
      %562 = vmatpush1.msra.mxu0 0.0
      %563 = vmatprep.subr.mxu0 0.0
      %564 = vmatpush1.msra.mxu0 0.0
      %565 = vmatprep.subr.mxu0 0.0
      %566 = vmatpush1.msra.mxu0 0.0
      %567 = vmatprep.subr.mxu0 0.0
      %568 = vmatpush1.msra.mxu0 0.0
      %569 = vmatprep.subr.mxu0 0.0
      %570 = vmatpush1.msra.mxu0 0.0
      %571 = vmatprep.subr.mxu0 0.0
      %572 = vmatpush1.msra.mxu0 0.0
      %573 = vmatprep.subr.mxu0 0.0
      %574 = vmatpush1.msra.mxu0 0.0
      %575 = vmatprep.subr.mxu0 0.0
      %576 = vmatpush1.msra.mxu0 0.0
      %577 = vmatprep.subr.mxu0 0.0
      %578 = vmatpush1.msra.mxu0 0.0
      %579 = vmatprep.subr.mxu0 0.0
      %580 = vmatpush1.msra.mxu0 0.0
      %581 = vmatprep.subr.mxu0 0.0
      %582 = vmatpush1.msra.mxu0 0.0
      %583 = vmatprep.subr.mxu0 0.0
      %584 = vmatpush1.msra.mxu0 0.0
      %585 = vmatprep.subr.mxu0 0.0
      %586 = vmatpush1.msra.mxu0 0.0
      %587 = vmatprep.subr.mxu0 0.0
      %588 = vmatpush1.msra.mxu0 0.0
      %589 = vmatprep.subr.mxu0 0.0
      %590 = vmatpush1.msra.mxu0 0.0
      %591 = vmatprep.subr.mxu0 0.0
      %592 = vmatpush1.msra.mxu0 0.0
      %593 = vmatprep.subr.mxu0 0.0
      %594 = vmatpush1.msra.mxu0 0.0
      %595 = vmatprep.subr.mxu0 0.0
      %596 = vmatpush1.msra.mxu0 0.0
      %597 = vmatprep.subr.mxu0 0.0
      %598 = vmatpush1.msra.mxu0 0.0
      %599 = vmatprep.subr.mxu0 0.0
      %600 = vmatpush1.msra.mxu0 0.0
      %601 = vmatprep.subr.mxu0 0.0
      %602 = vmatpush1.msra.mxu0 0.0
      %603 = vmatprep.subr.mxu0 0.0
      %604 = vmatpush1.msra.mxu0 0.0
      %605 = vmatprep.subr.mxu0 0.0
      %606 = vmatpush1.msra.mxu0 0.0
      %607 = vmatprep.mubr.f32.mxu0 0.0
      %608 = vmatmul.mubr.f32.gmra.mrb[0].mxu0 %v541
      %v609 = vpop.f32.mrb[0].mxu0
      %v610 = vadd.f32 0.0, %v609
      %v611 = vpop.f32.mrb[0].mxu0
      %612 = vdwg.mxu0
      %v613 = vadd.f32 %v524, %v610
      %v615 = vlaneseq
      %v616 = vshrl.u32 %v615, 7
      %v617 = vsub.s32 0, %v616
      %v618 = vrot.slane %v244, %v617
      %v620 = vmul.f32 %v613, %v618
      %621 = vadd.xlane.f32.xlu0 %v620
      %v622 = vpop.xlane.xlu0 %621
      %v623 = vadd.f32 %v622, 0.0
      %v624 = vmul.f32 %v620, %v613
      %625 = vadd.xlane.f32.xlu0 %v624
      %v626 = vpop.xlane.xlu0 %625
      %v627 = vadd.f32 %v626, 0.0
      %628 = vst [vmem:[%s235] sm:$0xff] %v613
      %vm629 = vcmask 7168
      %630 = vst.msk [vmem:[%s239] sm:$0xff] %vm629, %v623
      %631 = vst.msk [vmem:[%s243] sm:$0xff] %vm629, %v627
      %p632 = scmp.lt.s32.totalorder %s17, 1
      %s633 = scalar_select %p632, %s17, 1
      %s634 = smul.addr %s633, 8
      %s635 = scalar_lea.vmem %s3, %s634
      %p636 = scmp.lt.s32.totalorder %s17, 1
      %s637 = scalar_select %p636, %s17, 1
      %s638 = smul.addr %s637, 8
      %s639 = scalar_lea.vmem %s4, %s638
      %p640 = scmp.lt.s32.totalorder %s17, 1
      %s641 = scalar_select %p640, %s17, 1
      %s642 = smul.addr %s641, 8
      %s643 = scalar_lea.vmem %s5, %s642
      // Predicated region
      $region33: #{conv2d_layer.2} parent=31 // pred_check
        %p644 = pneg %p103
      $region34: #{conv2d_layer.2} parent=31 // pred_check_branch
        %646 = sbr.rel (%p644) target = $region36
      $region35: #{conv2d_layer.2} parent=31 // pred_region
        _
      $region36: #{conv2d_layer.2} parent=31 // pred_fallthru
        _
      // Predicated region
      $region37: #{conv2d_layer.2} parent=31 // pred_check
        %p647 = pneg %p129
      $region38: #{conv2d_layer.2} parent=31 // pred_check_branch
        %649 = sbr.rel (%p647) target = $region40
      $region39: #{conv2d_layer.2} parent=31 // pred_region
        _
      $region40: #{conv2d_layer.2} parent=31 // pred_fallthru
        _
      // Predicated region
      $region41: #{conv2d_layer.2} parent=31 // pred_check
        %p650 = pneg %p155
      $region42: #{conv2d_layer.2} parent=31 // pred_check_branch
        %652 = sbr.rel (%p650) target = $region44
      $region43: #{conv2d_layer.2} parent=31 // pred_region
        _
      $region44: #{conv2d_layer.2} parent=31 // pred_fallthru
        _
    $region32: #{conv2d_layer.2} parent=5 // pred_fallthru
      _
    %p653 = scmp.le.s32.totalorder 2, %s12
    // Predicated region
    $region45: #{conv2d_layer.2} parent=5 // pred_check
      %p654 = pneg %p653
    $region46: #{conv2d_layer.2} parent=5 // pred_check_branch
      %656 = sbr.rel (%p654) target = $region48
    $region47: #{conv2d_layer.2} parent=5 // pred_region
      %s657 = ssub.s32 %s12, 2
      // Predicated region
      $region49: #{conv2d_layer.2} parent=47 // pred_check
        %p658 = pneg %p109
      $region50: #{conv2d_layer.2} parent=47 // pred_check_branch
        %660 = sbr.rel (%p658) target = $region52
      $region51: #{conv2d_layer.2} parent=47 // pred_region
        %p661 = scmp.lt.s32.totalorder %s18, 1
        %s662 = scalar_select %p661, %s18, 1
        %s663 = smul.addr %s662, 8
        %s664 = scalar_lea.vmem %s3, %s663
      $region52: #{conv2d_layer.2} parent=47 // pred_fallthru
        _
      // Predicated region
      $region53: #{conv2d_layer.2} parent=47 // pred_check
        %p665 = pneg %p135
      $region54: #{conv2d_layer.2} parent=47 // pred_check_branch
        %667 = sbr.rel (%p665) target = $region56
      $region55: #{conv2d_layer.2} parent=47 // pred_region
        %p668 = scmp.lt.s32.totalorder %s18, 1
        %s669 = scalar_select %p668, %s18, 1
        %s670 = smul.addr %s669, 8
        %s671 = scalar_lea.vmem %s4, %s670
      $region56: #{conv2d_layer.2} parent=47 // pred_fallthru
        _
      // Predicated region
      $region57: #{conv2d_layer.2} parent=47 // pred_check
        %p672 = pneg %p161
      $region58: #{conv2d_layer.2} parent=47 // pred_check_branch
        %674 = sbr.rel (%p672) target = $region60
      $region59: #{conv2d_layer.2} parent=47 // pred_region
        %p675 = scmp.lt.s32.totalorder %s18, 1
        %s676 = scalar_select %p675, %s18, 1
        %s677 = smul.addr %s676, 8
        %s678 = scalar_lea.vmem %s5, %s677
      $region60: #{conv2d_layer.2} parent=47 // pred_fallthru
        _
    $region48: #{conv2d_layer.2} parent=5 // pred_fallthru
      _
  $region6: #{conv2d_layer.2} parent=0 // loop_footer
    %s16 = sadd.s32 1, %s12
  $region7: #{conv2d_layer.2} parent=0 // loop_footer_branch
    %11 = sbr.rel target = $region3
  $region8: #{conv2d_layer.2} parent=0 // loop_exit
    _

</llo_original>
